<compile_context>
chip_gen: v6e
topology: v6e:2x2x1
jax: 0.10.0
libtpu: 0.0.40
codegen_flags: <defaults>
</compile_context>

<pallas_src>
import functools

import jax
import jax.numpy as jnp
from jax import lax
from jax.experimental import pallas as pl
from jax.experimental.pallas import tpu as pltpu


# (out, J) x (TB, J), contracting the trailing J axis of both operands
# (A @ B^T, same pattern as q @ k^T) -> (out, TB): batch stays on the lanes.
_DN_XXT = (((1,), (1,)), ((), ()))


def _qnn_kernel(x_ref, wmc_ref, bmc_ref, wlc1_ref, blc1_ref,
                wlc2_ref, blc2_ref, wsc1_ref, bsc1_ref, wsc2_ref, bsc2_ref,
                y_ref):
    # x block streamed in its natural (batch, J) layout; cast (no-op on the f32
    # path) to the layer-1 weights' compute dtype in-kernel.
    x = x_ref[...].astype(wmc_ref.dtype)                                    # (TB, J)

    # --- layer 1: three small matmuls sharing the x tile, f32 accumulation ---
    m = jnp.maximum(
        lax.dot_general(wmc_ref[...], x, _DN_XXT,
                        preferred_element_type=jnp.float32) + bmc_ref[...],
        0.0)                                                                 # (K,  TB)
    l1 = jax.nn.sigmoid(
        lax.dot_general(wlc1_ref[...], x, _DN_XXT,
                        preferred_element_type=jnp.float32) + blc1_ref[...]) # (H,  TB)
    s1 = jnp.tanh(
        lax.dot_general(wsc1_ref[...], x, _DN_XXT,
                        preferred_element_type=jnp.float32) + bsc1_ref[...]) # (K*, TB)

    # --- layer 2: tiny f32-resident weights (no dtype round trips) ---
    l = jax.nn.sigmoid(
        jnp.dot(wlc2_ref[...], l1, preferred_element_type=jnp.float32)
        + blc2_ref[...])                                                     # (K, TB)
    s = jnp.tanh(
        jnp.dot(wsc2_ref[...], s1, preferred_element_type=jnp.float32)
        + bsc2_ref[...])                                                     # (K, TB)

    # --- gate & output (lane-dense, full-width store) ---
    y_ref[...] = jax.nn.sigmoid(l * m + (1.0 - l) * s).astype(y_ref.dtype)


def _round_up(a, m):
    return ((a + m - 1) // m) * m


@functools.partial(
    jax.jit, static_argnames=("block_batch", "compute_dtype", "batch_major_output"))
def qnn_forward(x, wmc, bmc, wlc1, blc1, wlc2, blc2, wsc1, bsc1, wsc2, bsc2,
                *, block_batch=16384, compute_dtype=jnp.float32,
                batch_major_output=True):
    """QNN forward.

    x: (B, J) f32; weights in PyTorch nn.Linear layout (out_features, in_features),
    biases (out_features,). Returns y: (B, K) f32 (or (K, B) if
    batch_major_output=False, which also skips the final transpose pass).
    """
    B, J = x.shape
    K = wmc.shape[0]
    H = wlc1.shape[0]
    Kstar = wsc1.shape[0]

    # ---- batch-tile selection -------------------------------------------------
    # Large tile so per-step HBM bytes dwarf the ~0.35 us fixed pipeline overhead,
    # clamped to (a) the batch (no massive padding waste for small B) and (b) a
    # VMEM budget: the streamed (TB, J) f32 block pads J up to the 128-lane width
    # in VMEM (~TB*512 B per buffer) even though the DMA only moves TB*J*4 B.
    x_lane_bytes = _round_up(J, 128) * x.dtype.itemsize
    y_sublane_bytes = _round_up(K, 8) * 4
    per_row_vmem = 2 * x_lane_bytes + 2 * y_sublane_bytes      # double-buffered streams
    vmem_budget = 24 * 1024 * 1024                             # headroom under 32 MiB scope
    tb_vmem_cap = max(128, (vmem_budget // per_row_vmem) // 128 * 128)

    B_min = _round_up(B, 128)
    TB = min(max(128, _round_up(block_batch, 128)), B_min, tb_vmem_cap)
    steps = pl.cdiv(B_min, TB)
    # v7x megacore: prefer >= 2 grid steps when it adds no extra padding so the
    # "parallel" batch axis can split across both TensorCores.
    if steps == 1 and B_min >= 256 and (B_min // 2) % 128 == 0:
        TB, steps = B_min // 2, 2
    B_pad = steps * TB

    # x streamed directly; only pad the batch when not already tile-aligned.
    x_in = x if B_pad == B else jnp.pad(x, ((0, B_pad - B), (0, 0)))

    # Layer-1 weights in the compute dtype (f32 by default; bf16 optional).
    wmc_c = wmc.astype(compute_dtype)
    wlc1_c = wlc1.astype(compute_dtype)
    wsc1_c = wsc1.astype(compute_dtype)
    # Layer-2 weights and all biases stay f32 (tiny resident refs).
    wlc2_c = wlc2.astype(jnp.float32)
    wsc2_c = wsc2.astype(jnp.float32)
    bmc_c, blc1_c, bsc1_c, blc2_c, bsc2_c = (
        b.astype(jnp.float32)[:, None] for b in (bmc, blc1, bsc1, blc2, bsc2))

    resident = lambda shape: pl.BlockSpec(shape, lambda i: (0, 0))
    in_specs = [
        pl.BlockSpec((TB, J), lambda i: (i, 0)),   # x (streamed over the batch)
        resident((K, J)), resident((K, 1)),        # mc  weight, bias
        resident((H, J)), resident((H, 1)),        # lc1 weight, bias
        resident((K, H)), resident((K, 1)),        # lc2 weight, bias
        resident((Kstar, J)), resident((Kstar, 1)),# sc1 weight, bias
        resident((K, Kstar)), resident((K, 1)),    # sc2 weight, bias
    ]
    out_specs = pl.BlockSpec((K, TB), lambda i: (0, i))

    # Advisory cost estimate for XLA's scheduler.
    flops = 2 * B_pad * (J * (K + H + Kstar) + H * K + Kstar * K)
    transcendentals = B_pad * (H + Kstar + 3 * K)
    param_bytes = sum(int(a.size) * a.dtype.itemsize
                      for a in (wmc_c, bmc_c, wlc1_c, blc1_c, wlc2_c, blc2_c,
                                wsc1_c, bsc1_c, wsc2_c, bsc2_c))
    bytes_accessed = int(x_in.size) * x_in.dtype.itemsize + K * B_pad * 4 + param_bytes

    yT = pl.pallas_call(
        _qnn_kernel,
        out_shape=jax.ShapeDtypeStruct((K, B_pad), jnp.float32),
        grid=(steps,),
        in_specs=in_specs,
        out_specs=out_specs,
        compiler_params=pltpu.CompilerParams(
            dimension_semantics=("parallel",),     # shard batch grid over v7x's 2 TCs
            vmem_limit_bytes=32 * 1024 * 1024,     # explicit; TB cap keeps ~18 MB worst case
        ),
        cost_estimate=pl.CostEstimate(
            flops=flops,
            transcendentals=transcendentals,
            bytes_accessed=bytes_accessed,
        ),
    )(x_in, wmc_c, bmc_c, wlc1_c, blc1_c, wlc2_c, blc2_c, wsc1_c, bsc1_c,
      wsc2_c, bsc2_c)

    if B_pad != B:
        yT = yT[:, :B]
    return yT.T if batch_major_output else yT


def _reference(x, wmc, bmc, wlc1, blc1, wlc2, blc2, wsc1, bsc1, wsc2, bsc2):
    m = jnp.maximum(x @ wmc.T + bmc, 0.0)
    l = jax.nn.sigmoid(x @ wlc1.T + blc1)
    l = jax.nn.sigmoid(l @ wlc2.T + blc2)
    s = jnp.tanh(x @ wsc1.T + bsc1)
    s = jnp.tanh(s @ wsc2.T + bsc2)
    return jax.nn.sigmoid(l * m + (1.0 - l) * s)


if __name__ == "__main__":
    # Small shapes consistent with the module:
    #   K = 3 skills, J = 16 items -> q: (16, 3), K* = 2^3 - 1 - 3 = 4, H = K + K* = 7.
    K = 3
    J = 16
    K_STAR = (2 ** K) - 1 - K
    H = K + K_STAR
    B = 300                      # small batch; exercises batch padding + tile clamping

    key = jax.random.PRNGKey(0)
    keys = jax.random.split(key, 13)

    def linear_params(kw, kb, out_d, in_d):
        w = jax.random.normal(kw, (out_d, in_d), jnp.float32) * (1.0 / jnp.sqrt(in_d))
        b = jax.random.normal(kb, (out_d,), jnp.float32) * 0.1
        return w, b

    x = jax.random.normal(keys[0], (B, J), dtype=jnp.float32)
    wmc, bmc = linear_params(keys[1], keys[2], K, J)           # mc : J -> K
    wlc1, blc1 = linear_params(keys[3], keys[4], H, J)         # lc1: J -> H
    wlc2, blc2 = linear_params(keys[5], keys[6], K, H)         # lc2: H -> K
    wsc1, bsc1 = linear_params(keys[7], keys[8], K_STAR, J)    # sc1: J -> K*
    wsc2, bsc2 = linear_params(keys[9], keys[10], K, K_STAR)   # sc2: K* -> K
    params = (wmc, bmc, wlc1, blc1, wlc2, blc2, wsc1, bsc1, wsc2, bsc2)

    y_ref = _reference(x, *params)

    # Default f32 path (TB clamps to round_up(B,128)=384, single grid step).
    y = qnn_forward(x, *params)
    jax.block_until_ready(y)
    assert y.shape == (B, K)
    assert jnp.allclose(y, y_ref, atol=1e-3, rtol=0.0), float(jnp.max(jnp.abs(y - y_ref)))

    # Multi-step grid + tile clamp + bf16 layer-1 weights (f32 x stream + f32 acc).
    B2 = 1000
    x2 = jax.random.normal(keys[11], (B2, J), dtype=jnp.float32)
    y2_ref = _reference(x2, *params)
    y2 = qnn_forward(x2, *params, block_batch=256, compute_dtype=jnp.bfloat16)
    jax.block_until_ready(y2)
    assert y2.shape == (B2, K)
    assert jnp.allclose(y2, y2_ref, atol=2e-2, rtol=0.0), float(jnp.max(jnp.abs(y2 - y2_ref)))

    # (K, B) layout output path (skips the wrapper-side transpose entirely).
    yKB = qnn_forward(x, *params, batch_major_output=False)
    jax.block_until_ready(yKB)
    assert yKB.shape == (K, B)
    assert jnp.allclose(yKB.T, y_ref, atol=1e-3, rtol=0.0)

    print("KERNEL_OK")
</pallas_src>

<mosaic_0001>
module attributes {stable_mosaic.version = 11 : i64} {
  func.func @_qnn_kernel(%arg0: i32, %arg1: memref<384x16xf32, #tpu.memory_space<vmem>>, %arg2: memref<3x16xf32, #tpu.memory_space<vmem>>, %arg3: memref<3x1xf32, #tpu.memory_space<vmem>>, %arg4: memref<7x16xf32, #tpu.memory_space<vmem>>, %arg5: memref<7x1xf32, #tpu.memory_space<vmem>>, %arg6: memref<3x7xf32, #tpu.memory_space<vmem>>, %arg7: memref<3x1xf32, #tpu.memory_space<vmem>>, %arg8: memref<4x16xf32, #tpu.memory_space<vmem>>, %arg9: memref<4x1xf32, #tpu.memory_space<vmem>>, %arg10: memref<3x4xf32, #tpu.memory_space<vmem>>, %arg11: memref<3x1xf32, #tpu.memory_space<vmem>>, %arg12: memref<3x384xf32, #tpu.memory_space<vmem>>) attributes {dimension_semantics = [#tpu.dimension_semantics<parallel>], iteration_bounds = array<i64: 1>, scalar_prefetch = 0 : i64, scratch_operands = 0 : i64, tpu.core_type = #tpu.core_type<tc>, window_params = [{transform_indices = @transform_0, window_bounds = array<i64: 384, 16>}, {pipeline_mode = #tpu.pipeline_mode<synchronous>, transform_indices = @transform_1, window_bounds = array<i64: 3, 16>}, {pipeline_mode = #tpu.pipeline_mode<synchronous>, transform_indices = @transform_2, window_bounds = array<i64: 3, 1>}, {pipeline_mode = #tpu.pipeline_mode<synchronous>, transform_indices = @transform_3, window_bounds = array<i64: 7, 16>}, {pipeline_mode = #tpu.pipeline_mode<synchronous>, transform_indices = @transform_4, window_bounds = array<i64: 7, 1>}, {pipeline_mode = #tpu.pipeline_mode<synchronous>, transform_indices = @transform_5, window_bounds = array<i64: 3, 7>}, {pipeline_mode = #tpu.pipeline_mode<synchronous>, transform_indices = @transform_6, window_bounds = array<i64: 3, 1>}, {pipeline_mode = #tpu.pipeline_mode<synchronous>, transform_indices = @transform_7, window_bounds = array<i64: 4, 16>}, {pipeline_mode = #tpu.pipeline_mode<synchronous>, transform_indices = @transform_8, window_bounds = array<i64: 4, 1>}, {pipeline_mode = #tpu.pipeline_mode<synchronous>, transform_indices = @transform_9, window_bounds = array<i64: 3, 4>}, {pipeline_mode = #tpu.pipeline_mode<synchronous>, transform_indices = @transform_10, window_bounds = array<i64: 3, 1>}, {transform_indices = @transform_11, window_bounds = array<i64: 3, 384>}]} {
    %c0 = arith.constant 0 : index
    %c0_0 = arith.constant 0 : index
    %0 = vector.load %arg1[%c0, %c0_0] : memref<384x16xf32, #tpu.memory_space<vmem>>, vector<384x16xf32>
    %c0_1 = arith.constant 0 : index
    %c0_2 = arith.constant 0 : index
    %1 = vector.load %arg2[%c0_1, %c0_2] : memref<3x16xf32, #tpu.memory_space<vmem>>, vector<3x16xf32>
    %cst = arith.constant dense<0.000000e+00> : vector<3x384xf32>
    %2 = tpu.matmul %1, %0, %cst {dimension_numbers = #tpu.dot_dimension_numbers<[1], [1], [0], [0], [0, 0, 1, 0], [], []>} : vector<3x16xf32>, vector<384x16xf32>, vector<3x384xf32> -> vector<3x384xf32>
    %c0_3 = arith.constant 0 : index
    %c0_4 = arith.constant 0 : index
    %3 = vector.load %arg3[%c0_3, %c0_4] : memref<3x1xf32, #tpu.memory_space<vmem>>, vector<3x1xf32>
    %4 = vector.broadcast %3 : vector<3x1xf32> to vector<3x384xf32>
    %5 = arith.addf %2, %4 : vector<3x384xf32>
    %cst_5 = arith.constant 0.000000e+00 : f32
    %6 = vector.broadcast %cst_5 : f32 to vector<3x384xf32>
    %7 = arith.maximumf %5, %6 : vector<3x384xf32>
    %c0_6 = arith.constant 0 : index
    %c0_7 = arith.constant 0 : index
    %8 = vector.load %arg4[%c0_6, %c0_7] : memref<7x16xf32, #tpu.memory_space<vmem>>, vector<7x16xf32>
    %cst_8 = arith.constant dense<0.000000e+00> : vector<7x384xf32>
    %9 = tpu.matmul %8, %0, %cst_8 {dimension_numbers = #tpu.dot_dimension_numbers<[1], [1], [0], [0], [0, 0, 1, 0], [], []>} : vector<7x16xf32>, vector<384x16xf32>, vector<7x384xf32> -> vector<7x384xf32>
    %c0_9 = arith.constant 0 : index
    %c0_10 = arith.constant 0 : index
    %10 = vector.load %arg5[%c0_9, %c0_10] : memref<7x1xf32, #tpu.memory_space<vmem>>, vector<7x1xf32>
    %11 = vector.broadcast %10 : vector<7x1xf32> to vector<7x384xf32>
    %12 = arith.addf %9, %11 : vector<7x384xf32>
    %13 = arith.negf %12 : vector<7x384xf32>
    %14 = math.exp %13 : vector<7x384xf32>
    %cst_11 = arith.constant 1.000000e+00 : f32
    %15 = vector.broadcast %cst_11 : f32 to vector<7x384xf32>
    %16 = arith.addf %15, %14 : vector<7x384xf32>
    %17 = arith.divf %15, %16 : vector<7x384xf32>
    %c0_12 = arith.constant 0 : index
    %c0_13 = arith.constant 0 : index
    %18 = vector.load %arg8[%c0_12, %c0_13] : memref<4x16xf32, #tpu.memory_space<vmem>>, vector<4x16xf32>
    %cst_14 = arith.constant dense<0.000000e+00> : vector<4x384xf32>
    %19 = tpu.matmul %18, %0, %cst_14 {dimension_numbers = #tpu.dot_dimension_numbers<[1], [1], [0], [0], [0, 0, 1, 0], [], []>} : vector<4x16xf32>, vector<384x16xf32>, vector<4x384xf32> -> vector<4x384xf32>
    %c0_15 = arith.constant 0 : index
    %c0_16 = arith.constant 0 : index
    %20 = vector.load %arg9[%c0_15, %c0_16] : memref<4x1xf32, #tpu.memory_space<vmem>>, vector<4x1xf32>
    %21 = vector.broadcast %20 : vector<4x1xf32> to vector<4x384xf32>
    %22 = arith.addf %19, %21 : vector<4x384xf32>
    %23 = math.tanh %22 : vector<4x384xf32>
    %c0_17 = arith.constant 0 : index
    %c0_18 = arith.constant 0 : index
    %24 = vector.load %arg6[%c0_17, %c0_18] : memref<3x7xf32, #tpu.memory_space<vmem>>, vector<3x7xf32>
    %cst_19 = arith.constant dense<0.000000e+00> : vector<3x384xf32>
    %25 = tpu.matmul %24, %17, %cst_19 {dimension_numbers = #tpu.dot_dimension_numbers<[1], [0], [0], [1], [0, 0, 1, 1], [], []>} : vector<3x7xf32>, vector<7x384xf32>, vector<3x384xf32> -> vector<3x384xf32>
    %c0_20 = arith.constant 0 : index
    %c0_21 = arith.constant 0 : index
    %26 = vector.load %arg7[%c0_20, %c0_21] : memref<3x1xf32, #tpu.memory_space<vmem>>, vector<3x1xf32>
    %27 = vector.broadcast %26 : vector<3x1xf32> to vector<3x384xf32>
    %28 = arith.addf %25, %27 : vector<3x384xf32>
    %29 = arith.negf %28 : vector<3x384xf32>
    %30 = math.exp %29 : vector<3x384xf32>
    %cst_22 = arith.constant 1.000000e+00 : f32
    %31 = vector.broadcast %cst_22 : f32 to vector<3x384xf32>
    %32 = arith.addf %31, %30 : vector<3x384xf32>
    %33 = arith.divf %31, %32 : vector<3x384xf32>
    %c0_23 = arith.constant 0 : index
    %c0_24 = arith.constant 0 : index
    %34 = vector.load %arg10[%c0_23, %c0_24] : memref<3x4xf32, #tpu.memory_space<vmem>>, vector<3x4xf32>
    %cst_25 = arith.constant dense<0.000000e+00> : vector<3x384xf32>
    %35 = tpu.matmul %34, %23, %cst_25 {dimension_numbers = #tpu.dot_dimension_numbers<[1], [0], [0], [1], [0, 0, 1, 1], [], []>} : vector<3x4xf32>, vector<4x384xf32>, vector<3x384xf32> -> vector<3x384xf32>
    %c0_26 = arith.constant 0 : index
    %c0_27 = arith.constant 0 : index
    %36 = vector.load %arg11[%c0_26, %c0_27] : memref<3x1xf32, #tpu.memory_space<vmem>>, vector<3x1xf32>
    %37 = vector.broadcast %36 : vector<3x1xf32> to vector<3x384xf32>
    %38 = arith.addf %35, %37 : vector<3x384xf32>
    %39 = math.tanh %38 : vector<3x384xf32>
    %40 = arith.mulf %33, %7 : vector<3x384xf32>
    %cst_28 = arith.constant 1.000000e+00 : f32
    %41 = vector.broadcast %cst_28 : f32 to vector<3x384xf32>
    %42 = arith.subf %41, %33 : vector<3x384xf32>
    %43 = arith.mulf %42, %39 : vector<3x384xf32>
    %44 = arith.addf %40, %43 : vector<3x384xf32>
    %45 = arith.negf %44 : vector<3x384xf32>
    %46 = math.exp %45 : vector<3x384xf32>
    %cst_29 = arith.constant 1.000000e+00 : f32
    %47 = vector.broadcast %cst_29 : f32 to vector<3x384xf32>
    %48 = arith.addf %47, %46 : vector<3x384xf32>
    %49 = arith.divf %47, %48 : vector<3x384xf32>
    %c0_30 = arith.constant 0 : index
    %c0_31 = arith.constant 0 : index
    %50 = vector.load %arg12[%c0_30, %c0_31] : memref<3x384xf32, #tpu.memory_space<vmem>>, vector<3x384xf32>
    tpu.vector_store %arg12[%c0_30, %c0_31], %49 {strides = array<i32>} : memref<3x384xf32, #tpu.memory_space<vmem>>, vector<3x384xf32>,
    return
  }
  func.func @transform_0(%arg0: i32) -> (i32, i32) {
    %c0_i32 = arith.constant 0 : i32
    %c0_i32_0 = arith.constant 0 : i32
    return %arg0, %c0_i32 : i32, i32
  }
  func.func @transform_1(%arg0: i32) -> (i32, i32) {
    %c0_i32 = arith.constant 0 : i32
    %c0_i32_0 = arith.constant 0 : i32
    %c0_i32_1 = arith.constant 0 : i32
    return %c0_i32, %c0_i32_0 : i32, i32
  }
  func.func @transform_2(%arg0: i32) -> (i32, i32) {
    %c0_i32 = arith.constant 0 : i32
    %c0_i32_0 = arith.constant 0 : i32
    %c0_i32_1 = arith.constant 0 : i32
    return %c0_i32, %c0_i32_0 : i32, i32
  }
  func.func @transform_3(%arg0: i32) -> (i32, i32) {
    %c0_i32 = arith.constant 0 : i32
    %c0_i32_0 = arith.constant 0 : i32
    %c0_i32_1 = arith.constant 0 : i32
    return %c0_i32, %c0_i32_0 : i32, i32
  }
  func.func @transform_4(%arg0: i32) -> (i32, i32) {
    %c0_i32 = arith.constant 0 : i32
    %c0_i32_0 = arith.constant 0 : i32
    %c0_i32_1 = arith.constant 0 : i32
    return %c0_i32, %c0_i32_0 : i32, i32
  }
  func.func @transform_5(%arg0: i32) -> (i32, i32) {
    %c0_i32 = arith.constant 0 : i32
    %c0_i32_0 = arith.constant 0 : i32
    %c0_i32_1 = arith.constant 0 : i32
    return %c0_i32, %c0_i32_0 : i32, i32
  }
  func.func @transform_6(%arg0: i32) -> (i32, i32) {
    %c0_i32 = arith.constant 0 : i32
    %c0_i32_0 = arith.constant 0 : i32
    %c0_i32_1 = arith.constant 0 : i32
    return %c0_i32, %c0_i32_0 : i32, i32
  }
  func.func @transform_7(%arg0: i32) -> (i32, i32) {
    %c0_i32 = arith.constant 0 : i32
    %c0_i32_0 = arith.constant 0 : i32
    %c0_i32_1 = arith.constant 0 : i32
    return %c0_i32, %c0_i32_0 : i32, i32
  }
  func.func @transform_8(%arg0: i32) -> (i32, i32) {
    %c0_i32 = arith.constant 0 : i32
    %c0_i32_0 = arith.constant 0 : i32
    %c0_i32_1 = arith.constant 0 : i32
    return %c0_i32, %c0_i32_0 : i32, i32
  }
  func.func @transform_9(%arg0: i32) -> (i32, i32) {
    %c0_i32 = arith.constant 0 : i32
    %c0_i32_0 = arith.constant 0 : i32
    %c0_i32_1 = arith.constant 0 : i32
    return %c0_i32, %c0_i32_0 : i32, i32
  }
  func.func @transform_10(%arg0: i32) -> (i32, i32) {
    %c0_i32 = arith.constant 0 : i32
    %c0_i32_0 = arith.constant 0 : i32
    %c0_i32_1 = arith.constant 0 : i32
    return %c0_i32, %c0_i32_0 : i32, i32
  }
  func.func @transform_11(%arg0: i32) -> (i32, i32) {
    %c0_i32 = arith.constant 0 : i32
    %c0_i32_0 = arith.constant 0 : i32
    return %c0_i32, %arg0 : i32, i32
  }
}

</mosaic_0001>

<llo_original>
// kernel: qnn_forward.1
$region0: #{qnn_forward.1}
  #allocation0 [shape = 'u32[]', space=smem, size = 0x4, offset = 0x4, fixed_abs, tag = 'smem constant byte address 0x4 - core index']
  #allocation1 [shape = 'u32[144,128]{1,0:T(1,128)}', space=vmem, size = 0x12000, scoped, tag = 'internal scratch']
  %s0 = inlined_call_operand.vmem [shape: f32[384,16], index: 0, kind: input, shape index: {}]
  %s1 = inlined_call_operand.vmem [shape: f32[3,16], index: 1, kind: input, shape index: {}]
  %s2 = inlined_call_operand.vmem [shape: f32[3,1], index: 2, kind: input, shape index: {}]
  %s3 = inlined_call_operand.vmem [shape: f32[7,16], index: 3, kind: input, shape index: {}]
  %s4 = inlined_call_operand.vmem [shape: f32[7,1], index: 4, kind: input, shape index: {}]
  %s5 = inlined_call_operand.vmem [shape: f32[3,7], index: 5, kind: input, shape index: {}]
  %s6 = inlined_call_operand.vmem [shape: f32[3,1], index: 6, kind: input, shape index: {}]
  %s7 = inlined_call_operand.vmem [shape: f32[4,16], index: 7, kind: input, shape index: {}]
  %s8 = inlined_call_operand.vmem [shape: f32[4,1], index: 8, kind: input, shape index: {}]
  %s9 = inlined_call_operand.vmem [shape: f32[3,4], index: 9, kind: input, shape index: {}]
  %s10 = inlined_call_operand.vmem [shape: f32[3,1], index: 10, kind: input, shape index: {}]
  %s11 = inlined_call_operand.vmem [shape: f32[3,384], index: 11, kind: output, shape index: {}]
  %s12 = sld [smem:[#allocation0]]
  $region54: #{qnn_forward.1} parent=0
    _
  %s14 = ssub.s32 1, %s12
  %s15 = scalar_select 0, %s14, %s12
  // Predicated region
  $region2: #{qnn_forward.1} parent=0 // pred_check
    _
  $region3: #{qnn_forward.1} parent=0 // pred_check_branch
    %17 = sbr.rel (0) target = $region5
  $region4: #{qnn_forward.1} parent=0 // pred_region
    _
  $region5: #{qnn_forward.1} parent=0 // pred_fallthru
    _
  // Predicated region
  $region6: #{qnn_forward.1} parent=0 // pred_check
    _
  $region7: #{qnn_forward.1} parent=0 // pred_check_branch
    %19 = sbr.rel (0) target = $region9
  $region8: #{qnn_forward.1} parent=0 // pred_region
    _
  $region9: #{qnn_forward.1} parent=0 // pred_fallthru
    _
  // Predicated region
  $region10: #{qnn_forward.1} parent=0 // pred_check
    _
  $region11: #{qnn_forward.1} parent=0 // pred_check_branch
    %21 = sbr.rel (0) target = $region13
  $region12: #{qnn_forward.1} parent=0 // pred_region
    _
  $region13: #{qnn_forward.1} parent=0 // pred_fallthru
    _
  // Predicated region
  $region14: #{qnn_forward.1} parent=0 // pred_check
    _
  $region15: #{qnn_forward.1} parent=0 // pred_check_branch
    %23 = sbr.rel (0) target = $region17
  $region16: #{qnn_forward.1} parent=0 // pred_region
    _
  $region17: #{qnn_forward.1} parent=0 // pred_fallthru
    _
  // Predicated region
  $region18: #{qnn_forward.1} parent=0 // pred_check
    _
  $region19: #{qnn_forward.1} parent=0 // pred_check_branch
    %25 = sbr.rel (0) target = $region21
  $region20: #{qnn_forward.1} parent=0 // pred_region
    _
  $region21: #{qnn_forward.1} parent=0 // pred_fallthru
    _
  // Predicated region
  $region22: #{qnn_forward.1} parent=0 // pred_check
    _
  $region23: #{qnn_forward.1} parent=0 // pred_check_branch
    %27 = sbr.rel (0) target = $region25
  $region24: #{qnn_forward.1} parent=0 // pred_region
    _
  $region25: #{qnn_forward.1} parent=0 // pred_fallthru
    _
  // Predicated region
  $region26: #{qnn_forward.1} parent=0 // pred_check
    _
  $region27: #{qnn_forward.1} parent=0 // pred_check_branch
    %29 = sbr.rel (0) target = $region29
  $region28: #{qnn_forward.1} parent=0 // pred_region
    _
  $region29: #{qnn_forward.1} parent=0 // pred_fallthru
    _
  // Predicated region
  $region30: #{qnn_forward.1} parent=0 // pred_check
    _
  $region31: #{qnn_forward.1} parent=0 // pred_check_branch
    %31 = sbr.rel (0) target = $region33
  $region32: #{qnn_forward.1} parent=0 // pred_region
    _
  $region33: #{qnn_forward.1} parent=0 // pred_fallthru
    _
  // Predicated region
  $region34: #{qnn_forward.1} parent=0 // pred_check
    _
  $region35: #{qnn_forward.1} parent=0 // pred_check_branch
    %33 = sbr.rel (0) target = $region37
  $region36: #{qnn_forward.1} parent=0 // pred_region
    _
  $region37: #{qnn_forward.1} parent=0 // pred_fallthru
    _
  // Predicated region
  $region38: #{qnn_forward.1} parent=0 // pred_check
    _
  $region39: #{qnn_forward.1} parent=0 // pred_check_branch
    %35 = sbr.rel (0) target = $region41
  $region40: #{qnn_forward.1} parent=0 // pred_region
    _
  $region41: #{qnn_forward.1} parent=0 // pred_fallthru
    _
  // Predicated region
  $region42: #{qnn_forward.1} parent=0 // pred_check
    _
  $region43: #{qnn_forward.1} parent=0 // pred_check_branch
    %37 = sbr.rel (0) target = $region45
  $region44: #{qnn_forward.1} parent=0 // pred_region
    _
  $region45: #{qnn_forward.1} parent=0 // pred_fallthru
    _
  %v38 = vld [vmem:[%s0] sm:$0xff]
  %v39 = vld [vmem:[%s0 + $0x8] sm:$0xff]
  %v40 = vld [vmem:[%s0 + $0x10] sm:$0xff]
  %v41 = vld [vmem:[%s0 + $0x18] sm:$0xff]
  %v42 = vld [vmem:[%s0 + $0x20] sm:$0xff]
  %v43 = vld [vmem:[%s0 + $0x28] sm:$0xff]
  %v44 = vld [vmem:[%s0 + $0x30] sm:$0xff]
  %v45 = vld [vmem:[%s0 + $0x38] sm:$0xff]
  %v46 = vld [vmem:[%s0 + $0x40] sm:$0xff]
  %v47 = vld [vmem:[%s0 + $0x48] sm:$0xff]
  %v48 = vld [vmem:[%s0 + $0x50] sm:$0xff]
  %v49 = vld [vmem:[%s0 + $0x58] sm:$0xff]
  %v50 = vld [vmem:[%s0 + $0x60] sm:$0xff]
  %v51 = vld [vmem:[%s0 + $0x68] sm:$0xff]
  %v52 = vld [vmem:[%s0 + $0x70] sm:$0xff]
  %v53 = vld [vmem:[%s0 + $0x78] sm:$0xff]
  %v54 = vld [vmem:[%s0 + $0x80] sm:$0xff]
  %v55 = vld [vmem:[%s0 + $0x88] sm:$0xff]
  %v56 = vld [vmem:[%s0 + $0x90] sm:$0xff]
  %v57 = vld [vmem:[%s0 + $0x98] sm:$0xff]
  %v58 = vld [vmem:[%s0 + $0xa0] sm:$0xff]
  %v59 = vld [vmem:[%s0 + $0xa8] sm:$0xff]
  %v60 = vld [vmem:[%s0 + $0xb0] sm:$0xff]
  %v61 = vld [vmem:[%s0 + $0xb8] sm:$0xff]
  %v62 = vld [vmem:[%s0 + $0xc0] sm:$0xff]
  %v63 = vld [vmem:[%s0 + $0xc8] sm:$0xff]
  %v64 = vld [vmem:[%s0 + $0xd0] sm:$0xff]
  %v65 = vld [vmem:[%s0 + $0xd8] sm:$0xff]
  %v66 = vld [vmem:[%s0 + $0xe0] sm:$0xff]
  %v67 = vld [vmem:[%s0 + $0xe8] sm:$0xff]
  %v68 = vld [vmem:[%s0 + $0xf0] sm:$0xff]
  %v69 = vld [vmem:[%s0 + $0xf8] sm:$0xff]
  %v70 = vld [vmem:[%s0 + $0x100] sm:$0xff]
  %v71 = vld [vmem:[%s0 + $0x108] sm:$0xff]
  %v72 = vld [vmem:[%s0 + $0x110] sm:$0xff]
  %v73 = vld [vmem:[%s0 + $0x118] sm:$0xff]
  %v74 = vld [vmem:[%s0 + $0x120] sm:$0xff]
  %v75 = vld [vmem:[%s0 + $0x128] sm:$0xff]
  %v76 = vld [vmem:[%s0 + $0x130] sm:$0xff]
  %v77 = vld [vmem:[%s0 + $0x138] sm:$0xff]
  %v78 = vld [vmem:[%s0 + $0x140] sm:$0xff]
  %v79 = vld [vmem:[%s0 + $0x148] sm:$0xff]
  %v80 = vld [vmem:[%s0 + $0x150] sm:$0xff]
  %v81 = vld [vmem:[%s0 + $0x158] sm:$0xff]
  %v82 = vld [vmem:[%s0 + $0x160] sm:$0xff]
  %v83 = vld [vmem:[%s0 + $0x168] sm:$0xff]
  %v84 = vld [vmem:[%s0 + $0x170] sm:$0xff]
  %v85 = vld [vmem:[%s0 + $0x178] sm:$0xff]
  %v86 = vld [vmem:[%s1] sm:$0x7]
  %v87 = vld [vmem:[%s2] sm:$0x7]
  %89 = vset.pattern.permute.xlu0 0
  %90 = vperm.xlu0 %89, %v87
  %v91 = vpop.permute.xlu0 %90
  %vm93 = vcmask 130048
  %v95 = vsel %vm93, %v86, 0
  %v98 = vsel %vm93, %v38, 0
  %v101 = vsel %vm93, %v39, 0
  %v104 = vsel %vm93, %v40, 0
  %v107 = vsel %vm93, %v41, 0
  %v110 = vsel %vm93, %v42, 0
  %v113 = vsel %vm93, %v43, 0
  %v116 = vsel %vm93, %v44, 0
  %v119 = vsel %vm93, %v45, 0
  %v122 = vsel %vm93, %v46, 0
  %v125 = vsel %vm93, %v47, 0
  %v128 = vsel %vm93, %v48, 0
  %v131 = vsel %vm93, %v49, 0
  %v134 = vsel %vm93, %v50, 0
  %v137 = vsel %vm93, %v51, 0
  %v140 = vsel %vm93, %v52, 0
  %v143 = vsel %vm93, %v53, 0
  %v146 = vsel %vm93, %v54, 0
  %v149 = vsel %vm93, %v55, 0
  %v152 = vsel %vm93, %v56, 0
  %v155 = vsel %vm93, %v57, 0
  %v158 = vsel %vm93, %v58, 0
  %v161 = vsel %vm93, %v59, 0
  %v164 = vsel %vm93, %v60, 0
  %v167 = vsel %vm93, %v61, 0
  %v170 = vsel %vm93, %v62, 0
  %v173 = vsel %vm93, %v63, 0
  %v176 = vsel %vm93, %v64, 0
  %v179 = vsel %vm93, %v65, 0
  %v182 = vsel %vm93, %v66, 0
  %v185 = vsel %vm93, %v67, 0
  %v188 = vsel %vm93, %v68, 0
  %v191 = vsel %vm93, %v69, 0
  %v194 = vsel %vm93, %v70, 0
  %v197 = vsel %vm93, %v71, 0
  %v200 = vsel %vm93, %v72, 0
  %v203 = vsel %vm93, %v73, 0
  %v206 = vsel %vm93, %v74, 0
  %v209 = vsel %vm93, %v75, 0
  %v212 = vsel %vm93, %v76, 0
  %v215 = vsel %vm93, %v77, 0
  %v218 = vsel %vm93, %v78, 0
  %v221 = vsel %vm93, %v79, 0
  %v224 = vsel %vm93, %v80, 0
  %v227 = vsel %vm93, %v81, 0
  %v230 = vsel %vm93, %v82, 0
  %v233 = vsel %vm93, %v83, 0
  %v236 = vsel %vm93, %v84, 0
  %v239 = vsel %vm93, %v85, 0
  %241 = vmatprep.subr.mxu0 0.0
  %242 = vmatpush1.xpose.msra.mxu0 %v143
  %243 = vmatprep.subr.mxu0 0.0
  %244 = vmatpush1.xpose.msra.mxu0 %v140
  %245 = vmatprep.subr.mxu0 0.0
  %246 = vmatpush1.xpose.msra.mxu0 %v137
  %247 = vmatprep.subr.mxu0 0.0
  %248 = vmatpush1.xpose.msra.mxu0 %v134
  %249 = vmatprep.subr.mxu0 0.0
  %250 = vmatpush1.xpose.msra.mxu0 %v131
  %251 = vmatprep.subr.mxu0 0.0
  %252 = vmatpush1.xpose.msra.mxu0 %v128
  %253 = vmatprep.subr.mxu0 0.0
  %254 = vmatpush1.xpose.msra.mxu0 %v125
  %255 = vmatprep.subr.mxu0 0.0
  %256 = vmatpush1.xpose.msra.mxu0 %v122
  %257 = vmatprep.subr.mxu0 0.0
  %258 = vmatpush1.xpose.msra.mxu0 %v119
  %259 = vmatprep.subr.mxu0 0.0
  %260 = vmatpush1.xpose.msra.mxu0 %v116
  %261 = vmatprep.subr.mxu0 0.0
  %262 = vmatpush1.xpose.msra.mxu0 %v113
  %263 = vmatprep.subr.mxu0 0.0
  %264 = vmatpush1.xpose.msra.mxu0 %v110
  %265 = vmatprep.subr.mxu0 0.0
  %266 = vmatpush1.xpose.msra.mxu0 %v107
  %267 = vmatprep.subr.mxu0 0.0
  %268 = vmatpush1.xpose.msra.mxu0 %v104
  %269 = vmatprep.subr.mxu0 0.0
  %270 = vmatpush1.xpose.msra.mxu0 %v101
  %271 = vmatprep.subr.mxu0 0.0
  %272 = vmatpush1.xpose.msra.mxu0 %v98
  %273 = vmatprep.subr.mxu0 0.0
  %274 = vmatpush2.xpose.msra.mxu0 %v191
  %275 = vmatprep.subr.mxu0 0.0
  %276 = vmatpush2.xpose.msra.mxu0 %v188
  %277 = vmatprep.subr.mxu0 0.0
  %278 = vmatpush2.xpose.msra.mxu0 %v185
  %279 = vmatprep.subr.mxu0 0.0
  %280 = vmatpush2.xpose.msra.mxu0 %v182
  %281 = vmatprep.subr.mxu0 0.0
  %282 = vmatpush2.xpose.msra.mxu0 %v179
  %283 = vmatprep.subr.mxu0 0.0
  %284 = vmatpush2.xpose.msra.mxu0 %v176
  %285 = vmatprep.subr.mxu0 0.0
  %286 = vmatpush2.xpose.msra.mxu0 %v173
  %287 = vmatprep.subr.mxu0 0.0
  %288 = vmatpush2.xpose.msra.mxu0 %v170
  %289 = vmatprep.subr.mxu0 0.0
  %290 = vmatpush2.xpose.msra.mxu0 %v167
  %291 = vmatprep.subr.mxu0 0.0
  %292 = vmatpush2.xpose.msra.mxu0 %v164
  %293 = vmatprep.subr.mxu0 0.0
  %294 = vmatpush2.xpose.msra.mxu0 %v161
  %295 = vmatprep.subr.mxu0 0.0
  %296 = vmatpush2.xpose.msra.mxu0 %v158
  %297 = vmatprep.subr.mxu0 0.0
  %298 = vmatpush2.xpose.msra.mxu0 %v155
  %299 = vmatprep.subr.mxu0 0.0
  %300 = vmatpush2.xpose.msra.mxu0 %v152
  %301 = vmatprep.subr.mxu0 0.0
  %302 = vmatpush2.xpose.msra.mxu0 %v149
  %303 = vmatprep.subr.mxu0 0.0
  %304 = vmatpush2.xpose.msra.mxu0 %v146
  %305 = vmatprep.mubr.f32.mxu0 0.0
  %306 = vmatmul.mubr.f32.gmra.mxu0 %v95
  %v307 = vpop.f32.mrf.mxu0
  %v308 = vadd.f32 %v91, %v307
  %v309 = vpop.f32.mrf.mxu0
  %v310 = vadd.f32 %v91, %v309
  %311 = vdwg.mxu0
  %312 = vmatprep.subr.mxu0 0.0
  %313 = vmatpush1.xpose.msra.mxu0 %v239
  %314 = vmatprep.subr.mxu0 0.0
  %315 = vmatpush1.xpose.msra.mxu0 %v236
  %316 = vmatprep.subr.mxu0 0.0
  %317 = vmatpush1.xpose.msra.mxu0 %v233
  %318 = vmatprep.subr.mxu0 0.0
  %319 = vmatpush1.xpose.msra.mxu0 %v230
  %320 = vmatprep.subr.mxu0 0.0
  %321 = vmatpush1.xpose.msra.mxu0 %v227
  %322 = vmatprep.subr.mxu0 0.0
  %323 = vmatpush1.xpose.msra.mxu0 %v224
  %324 = vmatprep.subr.mxu0 0.0
  %325 = vmatpush1.xpose.msra.mxu0 %v221
  %326 = vmatprep.subr.mxu0 0.0
  %327 = vmatpush1.xpose.msra.mxu0 %v218
  %328 = vmatprep.subr.mxu0 0.0
  %329 = vmatpush1.xpose.msra.mxu0 %v215
  %330 = vmatprep.subr.mxu0 0.0
  %331 = vmatpush1.xpose.msra.mxu0 %v212
  %332 = vmatprep.subr.mxu0 0.0
  %333 = vmatpush1.xpose.msra.mxu0 %v209
  %334 = vmatprep.subr.mxu0 0.0
  %335 = vmatpush1.xpose.msra.mxu0 %v206
  %336 = vmatprep.subr.mxu0 0.0
  %337 = vmatpush1.xpose.msra.mxu0 %v203
  %338 = vmatprep.subr.mxu0 0.0
  %339 = vmatpush1.xpose.msra.mxu0 %v200
  %340 = vmatprep.subr.mxu0 0.0
  %341 = vmatpush1.xpose.msra.mxu0 %v197
  %342 = vmatprep.subr.mxu0 0.0
  %343 = vmatpush1.xpose.msra.mxu0 %v194
  %344 = vmatprep.subr.mxu0 0.0
  %345 = vmatpush2.xpose.msra.mxu0 0.0
  %346 = vmatprep.subr.mxu0 0.0
  %347 = vmatpush2.xpose.msra.mxu0 0.0
  %348 = vmatprep.subr.mxu0 0.0
  %349 = vmatpush2.xpose.msra.mxu0 0.0
  %350 = vmatprep.subr.mxu0 0.0
  %351 = vmatpush2.xpose.msra.mxu0 0.0
  %352 = vmatprep.subr.mxu0 0.0
  %353 = vmatpush2.xpose.msra.mxu0 0.0
  %354 = vmatprep.subr.mxu0 0.0
  %355 = vmatpush2.xpose.msra.mxu0 0.0
  %356 = vmatprep.subr.mxu0 0.0
  %357 = vmatpush2.xpose.msra.mxu0 0.0
  %358 = vmatprep.subr.mxu0 0.0
  %359 = vmatpush2.xpose.msra.mxu0 0.0
  %360 = vmatprep.subr.mxu0 0.0
  %361 = vmatpush2.xpose.msra.mxu0 0.0
  %362 = vmatprep.subr.mxu0 0.0
  %363 = vmatpush2.xpose.msra.mxu0 0.0
  %364 = vmatprep.subr.mxu0 0.0
  %365 = vmatpush2.xpose.msra.mxu0 0.0
  %366 = vmatprep.subr.mxu0 0.0
  %367 = vmatpush2.xpose.msra.mxu0 0.0
  %368 = vmatprep.subr.mxu0 0.0
  %369 = vmatpush2.xpose.msra.mxu0 0.0
  %370 = vmatprep.subr.mxu0 0.0
  %371 = vmatpush2.xpose.msra.mxu0 0.0
  %372 = vmatprep.subr.mxu0 0.0
  %373 = vmatpush2.xpose.msra.mxu0 0.0
  %374 = vmatprep.subr.mxu0 0.0
  %375 = vmatpush2.xpose.msra.mxu0 0.0
  %376 = vmatprep.mubr.f32.mxu0 0.0
  %377 = vmatmul.mubr.f32.gmra.mxu0 %v95
  %v378 = vpop.f32.mrf.mxu0
  %v379 = vadd.f32 %v91, %v378
  %v380 = vpop.f32.mrf.mxu0
  %381 = vdwg.mxu0
  %v382 = vmax.f32 %v308, 0.0
  %v383 = vmax.f32 %v310, 0.0
  %v384 = vmax.f32 %v379, 0.0
  %v385 = vld [vmem:[%s3] sm:$0x7f]
  %v386 = vld [vmem:[%s4] sm:$0x7f]
  %388 = vset.pattern.permute.xlu0 0
  %389 = vperm.xlu0 %388, %v386
  %v390 = vpop.permute.xlu0 %389
  %v393 = vsel %vm93, %v385, 0
  %395 = vmatprep.subr.mxu0 0.0
  %396 = vmatpush1.xpose.msra.mxu0 %v143
  %397 = vmatprep.subr.mxu0 0.0
  %398 = vmatpush1.xpose.msra.mxu0 %v140
  %399 = vmatprep.subr.mxu0 0.0
  %400 = vmatpush1.xpose.msra.mxu0 %v137
  %401 = vmatprep.subr.mxu0 0.0
  %402 = vmatpush1.xpose.msra.mxu0 %v134
  %403 = vmatprep.subr.mxu0 0.0
  %404 = vmatpush1.xpose.msra.mxu0 %v131
  %405 = vmatprep.subr.mxu0 0.0
  %406 = vmatpush1.xpose.msra.mxu0 %v128
  %407 = vmatprep.subr.mxu0 0.0
  %408 = vmatpush1.xpose.msra.mxu0 %v125
  %409 = vmatprep.subr.mxu0 0.0
  %410 = vmatpush1.xpose.msra.mxu0 %v122
  %411 = vmatprep.subr.mxu0 0.0
  %412 = vmatpush1.xpose.msra.mxu0 %v119
  %413 = vmatprep.subr.mxu0 0.0
  %414 = vmatpush1.xpose.msra.mxu0 %v116
  %415 = vmatprep.subr.mxu0 0.0
  %416 = vmatpush1.xpose.msra.mxu0 %v113
  %417 = vmatprep.subr.mxu0 0.0
  %418 = vmatpush1.xpose.msra.mxu0 %v110
  %419 = vmatprep.subr.mxu0 0.0
  %420 = vmatpush1.xpose.msra.mxu0 %v107
  %421 = vmatprep.subr.mxu0 0.0
  %422 = vmatpush1.xpose.msra.mxu0 %v104
  %423 = vmatprep.subr.mxu0 0.0
  %424 = vmatpush1.xpose.msra.mxu0 %v101
  %425 = vmatprep.subr.mxu0 0.0
  %426 = vmatpush1.xpose.msra.mxu0 %v98
  %427 = vmatprep.subr.mxu0 0.0
  %428 = vmatpush2.xpose.msra.mxu0 %v191
  %429 = vmatprep.subr.mxu0 0.0
  %430 = vmatpush2.xpose.msra.mxu0 %v188
  %431 = vmatprep.subr.mxu0 0.0
  %432 = vmatpush2.xpose.msra.mxu0 %v185
  %433 = vmatprep.subr.mxu0 0.0
  %434 = vmatpush2.xpose.msra.mxu0 %v182
  %435 = vmatprep.subr.mxu0 0.0
  %436 = vmatpush2.xpose.msra.mxu0 %v179
  %437 = vmatprep.subr.mxu0 0.0
  %438 = vmatpush2.xpose.msra.mxu0 %v176
  %439 = vmatprep.subr.mxu0 0.0
  %440 = vmatpush2.xpose.msra.mxu0 %v173
  %441 = vmatprep.subr.mxu0 0.0
  %442 = vmatpush2.xpose.msra.mxu0 %v170
  %443 = vmatprep.subr.mxu0 0.0
  %444 = vmatpush2.xpose.msra.mxu0 %v167
  %445 = vmatprep.subr.mxu0 0.0
  %446 = vmatpush2.xpose.msra.mxu0 %v164
  %447 = vmatprep.subr.mxu0 0.0
  %448 = vmatpush2.xpose.msra.mxu0 %v161
  %449 = vmatprep.subr.mxu0 0.0
  %450 = vmatpush2.xpose.msra.mxu0 %v158
  %451 = vmatprep.subr.mxu0 0.0
  %452 = vmatpush2.xpose.msra.mxu0 %v155
  %453 = vmatprep.subr.mxu0 0.0
  %454 = vmatpush2.xpose.msra.mxu0 %v152
  %455 = vmatprep.subr.mxu0 0.0
  %456 = vmatpush2.xpose.msra.mxu0 %v149
  %457 = vmatprep.subr.mxu0 0.0
  %458 = vmatpush2.xpose.msra.mxu0 %v146
  %459 = vmatprep.mubr.f32.mxu0 0.0
  %460 = vmatmul.mubr.f32.gmra.mxu0 %v393
  %v461 = vpop.f32.mrf.mxu0
  %v462 = vadd.f32 %v390, %v461
  %v463 = vpop.f32.mrf.mxu0
  %v464 = vadd.f32 %v390, %v463
  %465 = vdwg.mxu0
  %466 = vmatprep.subr.mxu0 0.0
  %467 = vmatpush1.xpose.msra.mxu0 %v239
  %468 = vmatprep.subr.mxu0 0.0
  %469 = vmatpush1.xpose.msra.mxu0 %v236
  %470 = vmatprep.subr.mxu0 0.0
  %471 = vmatpush1.xpose.msra.mxu0 %v233
  %472 = vmatprep.subr.mxu0 0.0
  %473 = vmatpush1.xpose.msra.mxu0 %v230
  %474 = vmatprep.subr.mxu0 0.0
  %475 = vmatpush1.xpose.msra.mxu0 %v227
  %476 = vmatprep.subr.mxu0 0.0
  %477 = vmatpush1.xpose.msra.mxu0 %v224
  %478 = vmatprep.subr.mxu0 0.0
  %479 = vmatpush1.xpose.msra.mxu0 %v221
  %480 = vmatprep.subr.mxu0 0.0
  %481 = vmatpush1.xpose.msra.mxu0 %v218
  %482 = vmatprep.subr.mxu0 0.0
  %483 = vmatpush1.xpose.msra.mxu0 %v215
  %484 = vmatprep.subr.mxu0 0.0
  %485 = vmatpush1.xpose.msra.mxu0 %v212
  %486 = vmatprep.subr.mxu0 0.0
  %487 = vmatpush1.xpose.msra.mxu0 %v209
  %488 = vmatprep.subr.mxu0 0.0
  %489 = vmatpush1.xpose.msra.mxu0 %v206
  %490 = vmatprep.subr.mxu0 0.0
  %491 = vmatpush1.xpose.msra.mxu0 %v203
  %492 = vmatprep.subr.mxu0 0.0
  %493 = vmatpush1.xpose.msra.mxu0 %v200
  %494 = vmatprep.subr.mxu0 0.0
  %495 = vmatpush1.xpose.msra.mxu0 %v197
  %496 = vmatprep.subr.mxu0 0.0
  %497 = vmatpush1.xpose.msra.mxu0 %v194
  %498 = vmatprep.subr.mxu0 0.0
  %499 = vmatpush2.xpose.msra.mxu0 0.0
  %500 = vmatprep.subr.mxu0 0.0
  %501 = vmatpush2.xpose.msra.mxu0 0.0
  %502 = vmatprep.subr.mxu0 0.0
  %503 = vmatpush2.xpose.msra.mxu0 0.0
  %504 = vmatprep.subr.mxu0 0.0
  %505 = vmatpush2.xpose.msra.mxu0 0.0
  %506 = vmatprep.subr.mxu0 0.0
  %507 = vmatpush2.xpose.msra.mxu0 0.0
  %508 = vmatprep.subr.mxu0 0.0
  %509 = vmatpush2.xpose.msra.mxu0 0.0
  %510 = vmatprep.subr.mxu0 0.0
  %511 = vmatpush2.xpose.msra.mxu0 0.0
  %512 = vmatprep.subr.mxu0 0.0
  %513 = vmatpush2.xpose.msra.mxu0 0.0
  %514 = vmatprep.subr.mxu0 0.0
  %515 = vmatpush2.xpose.msra.mxu0 0.0
  %516 = vmatprep.subr.mxu0 0.0
  %517 = vmatpush2.xpose.msra.mxu0 0.0
  %518 = vmatprep.subr.mxu0 0.0
  %519 = vmatpush2.xpose.msra.mxu0 0.0
  %520 = vmatprep.subr.mxu0 0.0
  %521 = vmatpush2.xpose.msra.mxu0 0.0
  %522 = vmatprep.subr.mxu0 0.0
  %523 = vmatpush2.xpose.msra.mxu0 0.0
  %524 = vmatprep.subr.mxu0 0.0
  %525 = vmatpush2.xpose.msra.mxu0 0.0
  %526 = vmatprep.subr.mxu0 0.0
  %527 = vmatpush2.xpose.msra.mxu0 0.0
  %528 = vmatprep.subr.mxu0 0.0
  %529 = vmatpush2.xpose.msra.mxu0 0.0
  %530 = vmatprep.mubr.f32.mxu0 0.0
  %531 = vmatmul.mubr.f32.gmra.mxu0 %v393
  %v532 = vpop.f32.mrf.mxu0
  %v533 = vadd.f32 %v390, %v532
  %v534 = vpop.f32.mrf.mxu0
  %535 = vdwg.mxu0
  %v536 = vxor.u32 %v462, 2147483648
  %v537 = vxor.u32 %v464, 2147483648
  %v538 = vxor.u32 %v533, 2147483648
  %v539 = vmul.f32 %v536, 1.442695
  %v540 = vpow.pop %v539
  %v541 = vmul.f32 %v537, 1.442695
  %v542 = vpow.pop %v541
  %v543 = vmul.f32 %v538, 1.442695
  %v544 = vpow.pop %v543
  %v545 = vadd.f32 %v540, 1.0
  %v546 = vadd.f32 %v542, 1.0
  %v547 = vadd.f32 %v544, 1.0
  %v548 = vrcp.pop %v545
  %v549 = vmul.f32 1.0, %v548
  %v550 = vrcp.pop %v546
  %v551 = vmul.f32 1.0, %v550
  %v552 = vrcp.pop %v547
  %v553 = vmul.f32 1.0, %v552
  %v554 = vld [vmem:[%s7] sm:$0xf]
  %v555 = vld [vmem:[%s8] sm:$0xf]
  %557 = vset.pattern.permute.xlu0 0
  %558 = vperm.xlu0 %557, %v555
  %v559 = vpop.permute.xlu0 %558
  %v562 = vsel %vm93, %v554, 0
  %564 = vmatprep.subr.mxu0 0.0
  %565 = vmatpush1.xpose.msra.mxu0 %v143
  %566 = vmatprep.subr.mxu0 0.0
  %567 = vmatpush1.xpose.msra.mxu0 %v140
  %568 = vmatprep.subr.mxu0 0.0
  %569 = vmatpush1.xpose.msra.mxu0 %v137
  %570 = vmatprep.subr.mxu0 0.0
  %571 = vmatpush1.xpose.msra.mxu0 %v134
  %572 = vmatprep.subr.mxu0 0.0
  %573 = vmatpush1.xpose.msra.mxu0 %v131
  %574 = vmatprep.subr.mxu0 0.0
  %575 = vmatpush1.xpose.msra.mxu0 %v128
  %576 = vmatprep.subr.mxu0 0.0
  %577 = vmatpush1.xpose.msra.mxu0 %v125
  %578 = vmatprep.subr.mxu0 0.0
  %579 = vmatpush1.xpose.msra.mxu0 %v122
  %580 = vmatprep.subr.mxu0 0.0
  %581 = vmatpush1.xpose.msra.mxu0 %v119
  %582 = vmatprep.subr.mxu0 0.0
  %583 = vmatpush1.xpose.msra.mxu0 %v116
  %584 = vmatprep.subr.mxu0 0.0
  %585 = vmatpush1.xpose.msra.mxu0 %v113
  %586 = vmatprep.subr.mxu0 0.0
  %587 = vmatpush1.xpose.msra.mxu0 %v110
  %588 = vmatprep.subr.mxu0 0.0
  %589 = vmatpush1.xpose.msra.mxu0 %v107
  %590 = vmatprep.subr.mxu0 0.0
  %591 = vmatpush1.xpose.msra.mxu0 %v104
  %592 = vmatprep.subr.mxu0 0.0
  %593 = vmatpush1.xpose.msra.mxu0 %v101
  %594 = vmatprep.subr.mxu0 0.0
  %595 = vmatpush1.xpose.msra.mxu0 %v98
  %596 = vmatprep.subr.mxu0 0.0
  %597 = vmatpush2.xpose.msra.mxu0 %v191
  %598 = vmatprep.subr.mxu0 0.0
  %599 = vmatpush2.xpose.msra.mxu0 %v188
  %600 = vmatprep.subr.mxu0 0.0
  %601 = vmatpush2.xpose.msra.mxu0 %v185
  %602 = vmatprep.subr.mxu0 0.0
  %603 = vmatpush2.xpose.msra.mxu0 %v182
  %604 = vmatprep.subr.mxu0 0.0
  %605 = vmatpush2.xpose.msra.mxu0 %v179
  %606 = vmatprep.subr.mxu0 0.0
  %607 = vmatpush2.xpose.msra.mxu0 %v176
  %608 = vmatprep.subr.mxu0 0.0
  %609 = vmatpush2.xpose.msra.mxu0 %v173
  %610 = vmatprep.subr.mxu0 0.0
  %611 = vmatpush2.xpose.msra.mxu0 %v170
  %612 = vmatprep.subr.mxu0 0.0
  %613 = vmatpush2.xpose.msra.mxu0 %v167
  %614 = vmatprep.subr.mxu0 0.0
  %615 = vmatpush2.xpose.msra.mxu0 %v164
  %616 = vmatprep.subr.mxu0 0.0
  %617 = vmatpush2.xpose.msra.mxu0 %v161
  %618 = vmatprep.subr.mxu0 0.0
  %619 = vmatpush2.xpose.msra.mxu0 %v158
  %620 = vmatprep.subr.mxu0 0.0
  %621 = vmatpush2.xpose.msra.mxu0 %v155
  %622 = vmatprep.subr.mxu0 0.0
  %623 = vmatpush2.xpose.msra.mxu0 %v152
  %624 = vmatprep.subr.mxu0 0.0
  %625 = vmatpush2.xpose.msra.mxu0 %v149
  %626 = vmatprep.subr.mxu0 0.0
  %627 = vmatpush2.xpose.msra.mxu0 %v146
  %628 = vmatprep.mubr.f32.mxu0 0.0
  %629 = vmatmul.mubr.f32.gmra.mxu0 %v562
  %v630 = vpop.f32.mrf.mxu0
  %v631 = vadd.f32 %v559, %v630
  %v632 = vpop.f32.mrf.mxu0
  %v633 = vadd.f32 %v559, %v632
  %634 = vdwg.mxu0
  %635 = vmatprep.subr.mxu0 0.0
  %636 = vmatpush1.xpose.msra.mxu0 %v239
  %637 = vmatprep.subr.mxu0 0.0
  %638 = vmatpush1.xpose.msra.mxu0 %v236
  %639 = vmatprep.subr.mxu0 0.0
  %640 = vmatpush1.xpose.msra.mxu0 %v233
  %641 = vmatprep.subr.mxu0 0.0
  %642 = vmatpush1.xpose.msra.mxu0 %v230
  %643 = vmatprep.subr.mxu0 0.0
  %644 = vmatpush1.xpose.msra.mxu0 %v227
  %645 = vmatprep.subr.mxu0 0.0
  %646 = vmatpush1.xpose.msra.mxu0 %v224
  %647 = vmatprep.subr.mxu0 0.0
  %648 = vmatpush1.xpose.msra.mxu0 %v221
  %649 = vmatprep.subr.mxu0 0.0
  %650 = vmatpush1.xpose.msra.mxu0 %v218
  %651 = vmatprep.subr.mxu0 0.0
  %652 = vmatpush1.xpose.msra.mxu0 %v215
  %653 = vmatprep.subr.mxu0 0.0
  %654 = vmatpush1.xpose.msra.mxu0 %v212
  %655 = vmatprep.subr.mxu0 0.0
  %656 = vmatpush1.xpose.msra.mxu0 %v209
  %657 = vmatprep.subr.mxu0 0.0
  %658 = vmatpush1.xpose.msra.mxu0 %v206
  %659 = vmatprep.subr.mxu0 0.0
  %660 = vmatpush1.xpose.msra.mxu0 %v203
  %661 = vmatprep.subr.mxu0 0.0
  %662 = vmatpush1.xpose.msra.mxu0 %v200
  %663 = vmatprep.subr.mxu0 0.0
  %664 = vmatpush1.xpose.msra.mxu0 %v197
  %665 = vmatprep.subr.mxu0 0.0
  %666 = vmatpush1.xpose.msra.mxu0 %v194
  %667 = vmatprep.subr.mxu0 0.0
  %668 = vmatpush2.xpose.msra.mxu0 0.0
  %669 = vmatprep.subr.mxu0 0.0
  %670 = vmatpush2.xpose.msra.mxu0 0.0
  %671 = vmatprep.subr.mxu0 0.0
  %672 = vmatpush2.xpose.msra.mxu0 0.0
  %673 = vmatprep.subr.mxu0 0.0
  %674 = vmatpush2.xpose.msra.mxu0 0.0
  %675 = vmatprep.subr.mxu0 0.0
  %676 = vmatpush2.xpose.msra.mxu0 0.0
  %677 = vmatprep.subr.mxu0 0.0
  %678 = vmatpush2.xpose.msra.mxu0 0.0
  %679 = vmatprep.subr.mxu0 0.0
  %680 = vmatpush2.xpose.msra.mxu0 0.0
  %681 = vmatprep.subr.mxu0 0.0
  %682 = vmatpush2.xpose.msra.mxu0 0.0
  %683 = vmatprep.subr.mxu0 0.0
  %684 = vmatpush2.xpose.msra.mxu0 0.0
  %685 = vmatprep.subr.mxu0 0.0
  %686 = vmatpush2.xpose.msra.mxu0 0.0
  %687 = vmatprep.subr.mxu0 0.0
  %688 = vmatpush2.xpose.msra.mxu0 0.0
  %689 = vmatprep.subr.mxu0 0.0
  %690 = vmatpush2.xpose.msra.mxu0 0.0
  %691 = vmatprep.subr.mxu0 0.0
  %692 = vmatpush2.xpose.msra.mxu0 0.0
  %693 = vmatprep.subr.mxu0 0.0
  %694 = vmatpush2.xpose.msra.mxu0 0.0
  %695 = vmatprep.subr.mxu0 0.0
  %696 = vmatpush2.xpose.msra.mxu0 0.0
  %697 = vmatprep.subr.mxu0 0.0
  %698 = vmatpush2.xpose.msra.mxu0 0.0
  %699 = vmatprep.mubr.f32.mxu0 0.0
  %700 = vmatmul.mubr.f32.gmra.mxu0 %v562
  %v701 = vpop.f32.mrf.mxu0
  %v702 = vadd.f32 %v559, %v701
  %v703 = vpop.f32.mrf.mxu0
  %704 = vdwg.mxu0
  %v705 = vtanh.pop %v631
  %v706 = vtanh.pop %v633
  %v707 = vtanh.pop %v702
  %v708 = vld [vmem:[%s5] sm:$0x7]
  %v709 = vld [vmem:[%s6] sm:$0x7]
  %711 = vset.pattern.permute.xlu0 0
  %712 = vperm.xlu0 %711, %v709
  %v713 = vpop.permute.xlu0 %712
  %vm715 = vcmask 56320
  %v717 = vsel %vm715, %v708, 0
  %vm719 = vcmask 1046528
  %v721 = vsel %vm719, %v549, 0
  %v724 = vsel %vm719, %v551, 0
  %v727 = vsel %vm719, %v553, 0
  %729 = vmatprep.subr.mxu0 0.0
  %730 = vmatpush1.msra.mxu0 0.0
  %731 = vmatprep.subr.mxu0 0.0
  %732 = vmatpush1.msra.mxu0 0.0
  %733 = vmatprep.subr.mxu0 0.0
  %734 = vmatpush1.msra.mxu0 0.0
  %735 = vmatprep.subr.mxu0 0.0
  %736 = vmatpush1.msra.mxu0 0.0
  %737 = vmatprep.subr.mxu0 0.0
  %738 = vmatpush1.msra.mxu0 0.0
  %739 = vmatprep.subr.mxu0 0.0
  %740 = vmatpush1.msra.mxu0 0.0
  %741 = vmatprep.subr.mxu0 0.0
  %742 = vmatpush1.msra.mxu0 0.0
  %743 = vmatprep.subr.mxu0 0.0
  %744 = vmatpush1.msra.mxu0 0.0
  %745 = vmatprep.subr.mxu0 0.0
  %746 = vmatpush1.msra.mxu0 0.0
  %747 = vmatprep.subr.mxu0 0.0
  %748 = vmatpush1.msra.mxu0 0.0
  %749 = vmatprep.subr.mxu0 0.0
  %750 = vmatpush1.msra.mxu0 0.0
  %751 = vmatprep.subr.mxu0 0.0
  %752 = vmatpush1.msra.mxu0 0.0
  %753 = vmatprep.subr.mxu0 0.0
  %754 = vmatpush1.msra.mxu0 0.0
  %755 = vmatprep.subr.mxu0 0.0
  %756 = vmatpush1.msra.mxu0 0.0
  %757 = vmatprep.subr.mxu0 0.0
  %758 = vmatpush1.msra.mxu0 0.0
  %759 = vmatprep.subr.mxu0 %v724
  %760 = vmatpush1.msra.mxu0 %v721
  %761 = vmatprep.subr.mxu0 0.0
  %762 = vmatpush2.msra.mxu0 0.0
  %763 = vmatprep.subr.mxu0 0.0
  %764 = vmatpush2.msra.mxu0 0.0
  %765 = vmatprep.subr.mxu0 0.0
  %766 = vmatpush2.msra.mxu0 0.0
  %767 = vmatprep.subr.mxu0 0.0
  %768 = vmatpush2.msra.mxu0 0.0
  %769 = vmatprep.subr.mxu0 0.0
  %770 = vmatpush2.msra.mxu0 0.0
  %771 = vmatprep.subr.mxu0 0.0
  %772 = vmatpush2.msra.mxu0 0.0
  %773 = vmatprep.subr.mxu0 0.0
  %774 = vmatpush2.msra.mxu0 0.0
  %775 = vmatprep.subr.mxu0 0.0
  %776 = vmatpush2.msra.mxu0 0.0
  %777 = vmatprep.subr.mxu0 0.0
  %778 = vmatpush2.msra.mxu0 0.0
  %779 = vmatprep.subr.mxu0 0.0
  %780 = vmatpush2.msra.mxu0 0.0
  %781 = vmatprep.subr.mxu0 0.0
  %782 = vmatpush2.msra.mxu0 0.0
  %783 = vmatprep.subr.mxu0 0.0
  %784 = vmatpush2.msra.mxu0 0.0
  %785 = vmatprep.subr.mxu0 0.0
  %786 = vmatpush2.msra.mxu0 0.0
  %787 = vmatprep.subr.mxu0 0.0
  %788 = vmatpush2.msra.mxu0 0.0
  %789 = vmatprep.subr.mxu0 0.0
  %790 = vmatpush2.msra.mxu0 0.0
  %791 = vmatprep.subr.mxu0 0.0
  %792 = vmatpush2.msra.mxu0 0.0
  %793 = vmatprep.mubr.f32.mxu0 0.0
  %794 = vmatmul.mubr.f32.gmra.mxu0 %v717
  %v795 = vpop.f32.mrf.mxu0
  %v796 = vadd.f32 %v713, %v795
  %v797 = vpop.f32.mrf.mxu0
  %v798 = vadd.f32 %v713, %v797
  %799 = vdwg.mxu0
  %800 = vmatprep.subr.mxu0 0.0
  %801 = vmatpush1.msra.mxu0 0.0
  %802 = vmatprep.subr.mxu0 0.0
  %803 = vmatpush1.msra.mxu0 0.0
  %804 = vmatprep.subr.mxu0 0.0
  %805 = vmatpush1.msra.mxu0 0.0
  %806 = vmatprep.subr.mxu0 0.0
  %807 = vmatpush1.msra.mxu0 0.0
  %808 = vmatprep.subr.mxu0 0.0
  %809 = vmatpush1.msra.mxu0 0.0
  %810 = vmatprep.subr.mxu0 0.0
  %811 = vmatpush1.msra.mxu0 0.0
  %812 = vmatprep.subr.mxu0 0.0
  %813 = vmatpush1.msra.mxu0 0.0
  %814 = vmatprep.subr.mxu0 0.0
  %815 = vmatpush1.msra.mxu0 0.0
  %816 = vmatprep.subr.mxu0 0.0
  %817 = vmatpush1.msra.mxu0 0.0
  %818 = vmatprep.subr.mxu0 0.0
  %819 = vmatpush1.msra.mxu0 0.0
  %820 = vmatprep.subr.mxu0 0.0
  %821 = vmatpush1.msra.mxu0 0.0
  %822 = vmatprep.subr.mxu0 0.0
  %823 = vmatpush1.msra.mxu0 0.0
  %824 = vmatprep.subr.mxu0 0.0
  %825 = vmatpush1.msra.mxu0 0.0
  %826 = vmatprep.subr.mxu0 0.0
  %827 = vmatpush1.msra.mxu0 0.0
  %828 = vmatprep.subr.mxu0 0.0
  %829 = vmatpush1.msra.mxu0 0.0
  %830 = vmatprep.subr.mxu0 0.0
  %831 = vmatpush1.msra.mxu0 %v727
  %832 = vmatprep.subr.mxu0 0.0
  %833 = vmatpush2.msra.mxu0 0.0
  %834 = vmatprep.subr.mxu0 0.0
  %835 = vmatpush2.msra.mxu0 0.0
  %836 = vmatprep.subr.mxu0 0.0
  %837 = vmatpush2.msra.mxu0 0.0
  %838 = vmatprep.subr.mxu0 0.0
  %839 = vmatpush2.msra.mxu0 0.0
  %840 = vmatprep.subr.mxu0 0.0
  %841 = vmatpush2.msra.mxu0 0.0
  %842 = vmatprep.subr.mxu0 0.0
  %843 = vmatpush2.msra.mxu0 0.0
  %844 = vmatprep.subr.mxu0 0.0
  %845 = vmatpush2.msra.mxu0 0.0
  %846 = vmatprep.subr.mxu0 0.0
  %847 = vmatpush2.msra.mxu0 0.0
  %848 = vmatprep.subr.mxu0 0.0
  %849 = vmatpush2.msra.mxu0 0.0
  %850 = vmatprep.subr.mxu0 0.0
  %851 = vmatpush2.msra.mxu0 0.0
  %852 = vmatprep.subr.mxu0 0.0
  %853 = vmatpush2.msra.mxu0 0.0
  %854 = vmatprep.subr.mxu0 0.0
  %855 = vmatpush2.msra.mxu0 0.0
  %856 = vmatprep.subr.mxu0 0.0
  %857 = vmatpush2.msra.mxu0 0.0
  %858 = vmatprep.subr.mxu0 0.0
  %859 = vmatpush2.msra.mxu0 0.0
  %860 = vmatprep.subr.mxu0 0.0
  %861 = vmatpush2.msra.mxu0 0.0
  %862 = vmatprep.subr.mxu0 0.0
  %863 = vmatpush2.msra.mxu0 0.0
  %864 = vmatprep.mubr.f32.mxu0 0.0
  %865 = vmatmul.mubr.f32.gmra.mxu0 %v717
  %v866 = vpop.f32.mrf.mxu0
  %v867 = vadd.f32 %v713, %v866
  %v868 = vpop.f32.mrf.mxu0
  %869 = vdwg.mxu0
  %v870 = vxor.u32 %v796, 2147483648
  %v871 = vxor.u32 %v798, 2147483648
  %v872 = vxor.u32 %v867, 2147483648
  %v873 = vmul.f32 %v870, 1.442695
  %v874 = vpow.pop %v873
  %v875 = vmul.f32 %v871, 1.442695
  %v876 = vpow.pop %v875
  %v877 = vmul.f32 %v872, 1.442695
  %v878 = vpow.pop %v877
  %v879 = vadd.f32 %v874, 1.0
  %v880 = vadd.f32 %v876, 1.0
  %v881 = vadd.f32 %v878, 1.0
  %v882 = vrcp.pop %v879
  %v883 = vmul.f32 1.0, %v882
  %v884 = vrcp.pop %v880
  %v885 = vmul.f32 1.0, %v884
  %v886 = vrcp.pop %v881
  %v887 = vmul.f32 1.0, %v886
  %v888 = vld [vmem:[%s9] sm:$0x7]
  %v889 = vld [vmem:[%s10] sm:$0x7]
  %891 = vset.pattern.permute.xlu0 0
  %892 = vperm.xlu0 %891, %v889
  %v893 = vpop.permute.xlu0 %892
  %vm895 = vcmask 31744
  %v897 = vsel %vm895, %v888, 0
  %vm899 = vcmask 1043456
  %v901 = vsel %vm899, %v705, 0
  %v904 = vsel %vm899, %v706, 0
  %v907 = vsel %vm899, %v707, 0
  %909 = vmatprep.subr.mxu0 0.0
  %910 = vmatpush1.msra.mxu0 0.0
  %911 = vmatprep.subr.mxu0 0.0
  %912 = vmatpush1.msra.mxu0 0.0
  %913 = vmatprep.subr.mxu0 0.0
  %914 = vmatpush1.msra.mxu0 0.0
  %915 = vmatprep.subr.mxu0 0.0
  %916 = vmatpush1.msra.mxu0 0.0
  %917 = vmatprep.subr.mxu0 0.0
  %918 = vmatpush1.msra.mxu0 0.0
  %919 = vmatprep.subr.mxu0 0.0
  %920 = vmatpush1.msra.mxu0 0.0
  %921 = vmatprep.subr.mxu0 0.0
  %922 = vmatpush1.msra.mxu0 0.0
  %923 = vmatprep.subr.mxu0 0.0
  %924 = vmatpush1.msra.mxu0 0.0
  %925 = vmatprep.subr.mxu0 0.0
  %926 = vmatpush1.msra.mxu0 0.0
  %927 = vmatprep.subr.mxu0 0.0
  %928 = vmatpush1.msra.mxu0 0.0
  %929 = vmatprep.subr.mxu0 0.0
  %930 = vmatpush1.msra.mxu0 0.0
  %931 = vmatprep.subr.mxu0 0.0
  %932 = vmatpush1.msra.mxu0 0.0
  %933 = vmatprep.subr.mxu0 0.0
  %934 = vmatpush1.msra.mxu0 0.0
  %935 = vmatprep.subr.mxu0 0.0
  %936 = vmatpush1.msra.mxu0 0.0
  %937 = vmatprep.subr.mxu0 0.0
  %938 = vmatpush1.msra.mxu0 0.0
  %939 = vmatprep.subr.mxu0 %v904
  %940 = vmatpush1.msra.mxu0 %v901
  %941 = vmatprep.subr.mxu0 0.0
  %942 = vmatpush2.msra.mxu0 0.0
  %943 = vmatprep.subr.mxu0 0.0
  %944 = vmatpush2.msra.mxu0 0.0
  %945 = vmatprep.subr.mxu0 0.0
  %946 = vmatpush2.msra.mxu0 0.0
  %947 = vmatprep.subr.mxu0 0.0
  %948 = vmatpush2.msra.mxu0 0.0
  %949 = vmatprep.subr.mxu0 0.0
  %950 = vmatpush2.msra.mxu0 0.0
  %951 = vmatprep.subr.mxu0 0.0
  %952 = vmatpush2.msra.mxu0 0.0
  %953 = vmatprep.subr.mxu0 0.0
  %954 = vmatpush2.msra.mxu0 0.0
  %955 = vmatprep.subr.mxu0 0.0
  %956 = vmatpush2.msra.mxu0 0.0
  %957 = vmatprep.subr.mxu0 0.0
  %958 = vmatpush2.msra.mxu0 0.0
  %959 = vmatprep.subr.mxu0 0.0
  %960 = vmatpush2.msra.mxu0 0.0
  %961 = vmatprep.subr.mxu0 0.0
  %962 = vmatpush2.msra.mxu0 0.0
  %963 = vmatprep.subr.mxu0 0.0
  %964 = vmatpush2.msra.mxu0 0.0
  %965 = vmatprep.subr.mxu0 0.0
  %966 = vmatpush2.msra.mxu0 0.0
  %967 = vmatprep.subr.mxu0 0.0
  %968 = vmatpush2.msra.mxu0 0.0
  %969 = vmatprep.subr.mxu0 0.0
  %970 = vmatpush2.msra.mxu0 0.0
  %971 = vmatprep.subr.mxu0 0.0
  %972 = vmatpush2.msra.mxu0 0.0
  %973 = vmatprep.mubr.f32.mxu0 0.0
  %974 = vmatmul.mubr.f32.gmra.mxu0 %v897
  %v975 = vpop.f32.mrf.mxu0
  %v976 = vadd.f32 %v893, %v975
  %v977 = vpop.f32.mrf.mxu0
  %v978 = vadd.f32 %v893, %v977
  %979 = vdwg.mxu0
  %980 = vmatprep.subr.mxu0 0.0
  %981 = vmatpush1.msra.mxu0 0.0
  %982 = vmatprep.subr.mxu0 0.0
  %983 = vmatpush1.msra.mxu0 0.0
  %984 = vmatprep.subr.mxu0 0.0
  %985 = vmatpush1.msra.mxu0 0.0
  %986 = vmatprep.subr.mxu0 0.0
  %987 = vmatpush1.msra.mxu0 0.0
  %988 = vmatprep.subr.mxu0 0.0
  %989 = vmatpush1.msra.mxu0 0.0
  %990 = vmatprep.subr.mxu0 0.0
  %991 = vmatpush1.msra.mxu0 0.0
  %992 = vmatprep.subr.mxu0 0.0
  %993 = vmatpush1.msra.mxu0 0.0
  %994 = vmatprep.subr.mxu0 0.0
  %995 = vmatpush1.msra.mxu0 0.0
  %996 = vmatprep.subr.mxu0 0.0
  %997 = vmatpush1.msra.mxu0 0.0
  %998 = vmatprep.subr.mxu0 0.0
  %999 = vmatpush1.msra.mxu0 0.0
  %1000 = vmatprep.subr.mxu0 0.0
  %1001 = vmatpush1.msra.mxu0 0.0
  %1002 = vmatprep.subr.mxu0 0.0
  %1003 = vmatpush1.msra.mxu0 0.0
  %1004 = vmatprep.subr.mxu0 0.0
  %1005 = vmatpush1.msra.mxu0 0.0
  %1006 = vmatprep.subr.mxu0 0.0
  %1007 = vmatpush1.msra.mxu0 0.0
  %1008 = vmatprep.subr.mxu0 0.0
  %1009 = vmatpush1.msra.mxu0 0.0
  %1010 = vmatprep.subr.mxu0 0.0
  %1011 = vmatpush1.msra.mxu0 %v907
  %1012 = vmatprep.subr.mxu0 0.0
  %1013 = vmatpush2.msra.mxu0 0.0
  %1014 = vmatprep.subr.mxu0 0.0
  %1015 = vmatpush2.msra.mxu0 0.0
  %1016 = vmatprep.subr.mxu0 0.0
  %1017 = vmatpush2.msra.mxu0 0.0
  %1018 = vmatprep.subr.mxu0 0.0
  %1019 = vmatpush2.msra.mxu0 0.0
  %1020 = vmatprep.subr.mxu0 0.0
  %1021 = vmatpush2.msra.mxu0 0.0
  %1022 = vmatprep.subr.mxu0 0.0
  %1023 = vmatpush2.msra.mxu0 0.0
  %1024 = vmatprep.subr.mxu0 0.0
  %1025 = vmatpush2.msra.mxu0 0.0
  %1026 = vmatprep.subr.mxu0 0.0
  %1027 = vmatpush2.msra.mxu0 0.0
  %1028 = vmatprep.subr.mxu0 0.0
  %1029 = vmatpush2.msra.mxu0 0.0
  %1030 = vmatprep.subr.mxu0 0.0
  %1031 = vmatpush2.msra.mxu0 0.0
  %1032 = vmatprep.subr.mxu0 0.0
  %1033 = vmatpush2.msra.mxu0 0.0
  %1034 = vmatprep.subr.mxu0 0.0
  %1035 = vmatpush2.msra.mxu0 0.0
  %1036 = vmatprep.subr.mxu0 0.0
  %1037 = vmatpush2.msra.mxu0 0.0
  %1038 = vmatprep.subr.mxu0 0.0
  %1039 = vmatpush2.msra.mxu0 0.0
  %1040 = vmatprep.subr.mxu0 0.0
  %1041 = vmatpush2.msra.mxu0 0.0
  %1042 = vmatprep.subr.mxu0 0.0
  %1043 = vmatpush2.msra.mxu0 0.0
  %1044 = vmatprep.mubr.f32.mxu0 0.0
  %1045 = vmatmul.mubr.f32.gmra.mxu0 %v897
  %v1046 = vpop.f32.mrf.mxu0
  %v1047 = vadd.f32 %v893, %v1046
  %v1048 = vpop.f32.mrf.mxu0
  %1049 = vdwg.mxu0
  %v1050 = vtanh.pop %v976
  %v1051 = vtanh.pop %v978
  %v1052 = vtanh.pop %v1047
  %v1053 = vmul.f32 %v883, %v382
  %v1054 = vmul.f32 %v885, %v383
  %v1055 = vmul.f32 %v887, %v384
  %v1056 = vsub.f32 1.0, %v883
  %v1057 = vsub.f32 1.0, %v885
  %v1058 = vsub.f32 1.0, %v887
  %v1059 = vmul.f32 %v1056, %v1050
  %v1060 = vmul.f32 %v1057, %v1051
  %v1061 = vmul.f32 %v1058, %v1052
  %v1062 = vadd.f32 %v1053, %v1059
  %v1063 = vadd.f32 %v1054, %v1060
  %v1064 = vadd.f32 %v1055, %v1061
  %v1065 = vxor.u32 %v1062, 2147483648
  %v1066 = vxor.u32 %v1063, 2147483648
  %v1067 = vxor.u32 %v1064, 2147483648
  %v1068 = vmul.f32 %v1065, 1.442695
  %v1069 = vpow.pop %v1068
  %v1070 = vmul.f32 %v1066, 1.442695
  %v1071 = vpow.pop %v1070
  %v1072 = vmul.f32 %v1067, 1.442695
  %v1073 = vpow.pop %v1072
  %v1074 = vadd.f32 %v1069, 1.0
  %v1075 = vadd.f32 %v1071, 1.0
  %v1076 = vadd.f32 %v1073, 1.0
  %v1077 = vrcp.pop %v1074
  %v1078 = vmul.f32 1.0, %v1077
  %v1079 = vrcp.pop %v1075
  %v1080 = vmul.f32 1.0, %v1079
  %v1081 = vrcp.pop %v1076
  %v1082 = vmul.f32 1.0, %v1081
  %v1085 = vcombine.low %v1078, %v1080
  %1087 = vst [vmem:[%s11] sm:$0x77] %v1085
  %1088 = vst [vmem:[%s11 + $0x8] sm:$0x7] %v1082
  // Predicated region
  $region46: #{qnn_forward.1} parent=0 // pred_check
    _
  $region47: #{qnn_forward.1} parent=0 // pred_check_branch
    %1090 = sbr.rel (0) target = $region49
  $region48: #{qnn_forward.1} parent=0 // pred_region
    _
  $region49: #{qnn_forward.1} parent=0 // pred_fallthru
    _
  // Predicated region
  $region50: #{qnn_forward.1} parent=0 // pred_check
    _
  $region51: #{qnn_forward.1} parent=0 // pred_check_branch
    %1092 = sbr.rel (0) target = $region53
  $region52: #{qnn_forward.1} parent=0 // pred_region
    _
  $region53: #{qnn_forward.1} parent=0 // pred_fallthru
    _

</llo_original>
